<compile_context>
chip_gen: v6e
topology: v6e:2x2x1
jax: 0.10.0
libtpu: 0.0.40
codegen_flags: <defaults>
</compile_context>

<pallas_src>
import functools

import jax
import jax.numpy as jnp
from jax import lax
from jax.experimental import pallas as pl
from jax.experimental.pallas import tpu as pltpu

# Module hyper-parameters (DeformConv2d defaults).
KSIZE = 3
STRIDE = 1
DILATION = 2
PADDING = DILATION            # padding=dilation in the module
DEFORMABLE_GROUPS = 2
TILE_PIX = 1024               # lane-axis (pixel) tile per grid step
TILE_K = 2048                 # max reduction-axis tile (sublane axis)


def _pick_lane_tile(P, target=TILE_PIX):
    """Lane (pixel) tile: always a 128-multiple when P >= 128 so stores are
    unmasked vst except on the (masked) tail block; full extent only when P is
    itself lane-dense or too small to tile."""
    if P < 128:
        return P                              # full extent (only legal choice)
    if P % 128 == 0 and P <= target:
        return P                              # full extent, already lane-dense
    return min(target, (P // 128) * 128)      # cdiv grid masks the tail block


def _pick_k_tile(K, target=TILE_K):
    """Reduction tile: full K when small, otherwise a 128-multiple divisor of K
    (exact tiling -> no garbage K-tail feeding the accumulation)."""
    if K <= target:
        return K
    for tk in range(target, 127, -128):
        if K % tk == 0:
            return tk
    return K                                  # degenerate fallback: one step


def _deform_vmem_limit(Cout, tk, tile):
    """Scoped-VMEM limit derived from the actual block working set, capped at
    3/4 of physical VMEM (so v7x's 64 MiB is respected automatically)."""
    need = (2 * tk * tile * 2          # cols block, double-buffered, bf16
            + 2 * Cout * tk * 2        # weight slice, double-buffered, bf16
            + 2 * Cout * tile * 4      # output block, double-buffered, f32
            + Cout * tile * 4)         # f32 accumulator scratch
    limit = max(2 * need, 32 * 1024 * 1024)
    cap = 96 * 1024 * 1024
    try:
        cap = int(pltpu.get_tpu_info().vmem_capacity_bytes * 3 // 4)
    except Exception:
        pass
    return int(min(limit, cap))


# ---------------------------------------------------------------------------
# Pallas kernel: modulated deformable conv hot path
#   out[b, :, tile] = W(Cout, K) @ cols[b](K, tile),  K tiled on the grid.
# ---------------------------------------------------------------------------
def _deform_matmul_kernel(cols_ref, w_ref, o_ref, acc_ref):
    @pl.when(pl.program_id(2) == 0)
    def _():
        acc_ref[...] = jnp.zeros_like(acc_ref)

    acc_ref[...] += jnp.dot(w_ref[...], cols_ref[...],
                            preferred_element_type=jnp.float32)

    @pl.when(pl.program_id(2) == pl.num_programs(2) - 1)
    def _():
        o_ref[...] = acc_ref[...].astype(o_ref.dtype)


def pallas_deform_matmul(cols, w2):
    """cols: (B, K, P) bf16, w2: (Cout, K) bf16 -> (B, Cout, P) f32."""
    B, K, P = cols.shape
    Cout = w2.shape[0]
    tile = _pick_lane_tile(P)
    tk = _pick_k_tile(K)
    grid = (B, pl.cdiv(P, tile), pl.cdiv(K, tk))     # reduction axis last
    cost = pl.CostEstimate(
        flops=2 * B * Cout * K * P,
        transcendentals=0,
        bytes_accessed=(B * K * P * 2) + (Cout * K * 2) + (B * Cout * P * 4),
    )
    # TODO(synk): add pipeline_mode=pl.Buffered(3) on the cols BlockSpec if a
    # profile shows exposed DMA between steps (weight stays resident).
    return pl.pallas_call(
        _deform_matmul_kernel,
        out_shape=jax.ShapeDtypeStruct((B, Cout, P), jnp.float32),
        grid=grid,
        in_specs=[
            pl.BlockSpec((None, tk, tile), lambda b, i, k: (b, k, i)),
            pl.BlockSpec((Cout, tk), lambda b, i, k: (0, k)),
        ],
        out_specs=pl.BlockSpec((None, Cout, tile), lambda b, i, k: (b, 0, i)),
        scratch_shapes=[pltpu.VMEM((Cout, tile), jnp.float32)],
        compiler_params=pltpu.CompilerParams(
            dimension_semantics=("parallel", "parallel", "arbitrary"),
            vmem_limit_bytes=_deform_vmem_limit(Cout, tk, tile),
        ),
        cost_estimate=cost,
    )(cols, w2)


# ---------------------------------------------------------------------------
# JAX glue
# ---------------------------------------------------------------------------
def offset_conv_forward(x, w, b):
    """Grouped dilated Conv2d (groups = deformable_groups), bias=True, NCHW.
    Tiny branch (M = dg*3*KK output channels) -> XLA's native dilated conv,
    which avoids the 9x im2col HBM blow-up entirely."""
    om = lax.conv_general_dilated(
        x, w,
        window_strides=(STRIDE, STRIDE),
        padding=((PADDING, PADDING), (PADDING, PADDING)),
        rhs_dilation=(DILATION, DILATION),
        dimension_numbers=("NCHW", "OIHW", "NCHW"),
        feature_group_count=DEFORMABLE_GROUPS,
    )
    return om + b[None, :, None, None]


def build_deform_columns(x, offset, mask_logits, double_mask):
    """Bilinear deformable sampling (DCNv2 semantics, zero padding) with the
    sigmoid modulation mask folded into the bilinear coefficients.  Returns
    bf16 columns (B, Cin*KK, Ho*Wo); K-axis ordered (dg, Cg, KK) == Cin*KK,
    matching weight (Cout, Cin, K, K).reshape(Cout, -1)."""
    B, Cin, H, W = x.shape
    dg = DEFORMABLE_GROUPS
    Cg = Cin // dg
    KK = KSIZE * KSIZE
    Ho, Wo = offset.shape[2], offset.shape[3]

    off = offset.reshape(B, dg, KK, 2, Ho, Wo).astype(jnp.float32)
    off_y, off_x = off[:, :, :, 0], off[:, :, :, 1]

    ky = jnp.repeat(jnp.arange(KSIZE), KSIZE).astype(jnp.float32)   # kernel row per kk
    kx = jnp.tile(jnp.arange(KSIZE), KSIZE).astype(jnp.float32)     # kernel col per kk
    base_y = (jnp.arange(Ho, dtype=jnp.float32) * STRIDE - PADDING)[None, :, None] \
        + (ky * DILATION)[:, None, None]                            # (KK, Ho, 1)
    base_x = (jnp.arange(Wo, dtype=jnp.float32) * STRIDE - PADDING)[None, None, :] \
        + (kx * DILATION)[:, None, None]                            # (KK, 1, Wo)
    p_y = base_y[None, None] + off_y                                # (B, dg, KK, Ho, Wo)
    p_x = base_x[None, None] + off_x

    y0 = jnp.floor(p_y)
    x0 = jnp.floor(p_x)
    ly = p_y - y0
    lx = p_x - x0
    hy = 1.0 - ly
    hx = 1.0 - lx

    # Modulation mask folded into the (tiny, Cg-broadcast) bilinear weights so
    # the gathered values get exactly one multiply and the sum fuses straight
    # into the bf16 cast (no separate f32 cols materialize + recast pass).
    mask = jax.nn.sigmoid(mask_logits.astype(jnp.float32)).reshape(B, dg, KK, Ho, Wo)
    if double_mask:
        mask = mask * 2.0

    x_g = x.reshape(B, dg, Cg, H * W)

    def corner(yi, xi, wgt):
        valid = (yi >= 0) & (yi <= H - 1) & (xi >= 0) & (xi <= W - 1)
        yc = jnp.clip(yi, 0, H - 1).astype(jnp.int32)
        xc = jnp.clip(xi, 0, W - 1).astype(jnp.int32)
        idx = (yc * W + xc).reshape(B, dg, 1, KK * Ho * Wo)
        vals = jnp.take_along_axis(x_g, idx, axis=3).reshape(B, dg, Cg, KK, Ho, Wo)
        coef = (wgt * valid.astype(jnp.float32) * mask)[:, :, None]  # (B,dg,1,KK,Ho,Wo)
        return vals * coef

    sampled = (
        corner(y0, x0, hy * hx)
        + corner(y0, x0 + 1.0, hy * lx)
        + corner(y0 + 1.0, x0, ly * hx)
        + corner(y0 + 1.0, x0 + 1.0, ly * lx)
    )                                                               # (B, dg, Cg, KK, Ho, Wo)

    # bf16 on the way out: halves the HBM write of the (9x-blown-up) columns.
    return sampled.astype(jnp.bfloat16).reshape(B, Cin * KK, Ho * Wo)


# ---------------------------------------------------------------------------
# Full DeformConv2d forward
# ---------------------------------------------------------------------------
def deform_conv2d_forward(x, off_w, off_b, def_w, double_mask=True):
    offset_mask = offset_conv_forward(x, off_w, off_b)      # (B, dg*3*KK, Ho, Wo)
    KK = KSIZE * KSIZE
    offset_channel = DEFORMABLE_GROUPS * 2 * KK
    offset = offset_mask[:, :offset_channel]
    mask_logits = offset_mask[:, offset_channel:]

    cols = build_deform_columns(x, offset, mask_logits, double_mask)  # (B, Cin*KK, P) bf16
    Cout = def_w.shape[0]
    w2 = def_w.reshape(Cout, -1).astype(jnp.bfloat16)                 # (Cout, Cin*KK)

    out = pallas_deform_matmul(cols, w2)                              # (B, Cout, P) f32

    B = x.shape[0]
    Ho, Wo = offset.shape[2], offset.shape[3]
    return out.reshape(B, Cout, Ho, Wo)                               # NCHW, no transpose


# ---------------------------------------------------------------------------
# Independent pure-JAX reference (different code path: per-tap loop + einsum).
# ---------------------------------------------------------------------------
def deform_conv2d_reference(x, off_w, off_b, def_w, double_mask=True):
    B, Cin, H, W = x.shape
    dg = DEFORMABLE_GROUPS
    Cg = Cin // dg
    KK = KSIZE * KSIZE
    om = lax.conv_general_dilated(
        x, off_w,
        window_strides=(STRIDE, STRIDE),
        padding=((PADDING, PADDING), (PADDING, PADDING)),
        rhs_dilation=(DILATION, DILATION),
        dimension_numbers=("NCHW", "OIHW", "NCHW"),
        feature_group_count=dg,
    ) + off_b[None, :, None, None]
    oc = dg * 2 * KK
    offset = om[:, :oc]
    mask = jax.nn.sigmoid(om[:, oc:])
    if double_mask:
        mask = mask * 2.0
    Ho, Wo = offset.shape[2], offset.shape[3]
    Cout = def_w.shape[0]

    ys = jnp.arange(Ho, dtype=jnp.float32)[:, None] * STRIDE - PADDING
    xs = jnp.arange(Wo, dtype=jnp.float32)[None, :] * STRIDE - PADDING

    def bilinear(img, py, px):
        y0 = jnp.floor(py)
        x0 = jnp.floor(px)
        ly = py - y0
        lx = px - x0

        def gather(yi, xi):
            inb = (yi >= 0) & (yi <= H - 1) & (xi >= 0) & (xi <= W - 1)
            yc = jnp.clip(yi, 0, H - 1).astype(jnp.int32)
            xc = jnp.clip(xi, 0, W - 1).astype(jnp.int32)
            return img[:, yc, xc] * inb.astype(img.dtype)

        return (gather(y0, x0) * (1 - ly) * (1 - lx)
                + gather(y0, x0 + 1) * (1 - ly) * lx
                + gather(y0 + 1, x0) * ly * (1 - lx)
                + gather(y0 + 1, x0 + 1) * ly * lx)

    outs = []
    for b in range(B):
        acc = jnp.zeros((Cout, Ho, Wo), jnp.float32)
        for g in range(dg):
            img = x[b, g * Cg:(g + 1) * Cg]
            for kk in range(KK):
                ki, kj = divmod(kk, KSIZE)
                dy = offset[b, g * 2 * KK + 2 * kk]
                dx = offset[b, g * 2 * KK + 2 * kk + 1]
                py = ys + ki * DILATION + dy
                px = xs + kj * DILATION + dx
                samp = bilinear(img, py, px) * mask[b, g * KK + kk]   # (Cg, Ho, Wo)
                wk = def_w[:, g * Cg:(g + 1) * Cg, ki, kj]            # (Cout, Cg)
                acc = acc + jnp.einsum("oc,chw->ohw", wk, samp)
        outs.append(acc)
    return jnp.stack(outs, axis=0)


if __name__ == "__main__":
    B, Cin, H, W = 2, 4, 16, 16
    Cout = 8
    KK = KSIZE * KSIZE
    dg = DEFORMABLE_GROUPS

    key = jax.random.PRNGKey(0)
    k1, k2, k3, k4 = jax.random.split(key, 4)
    x = jax.random.normal(k1, (B, Cin, H, W), jnp.float32)

    # offset_conv: Conv2d(Cin, dg*3*KK, k=3, pad=dil=2, groups=dg, bias=True).
    # The PyTorch module zero-inits it; small deterministic random values are
    # used so the bilinear deformable-sampling path is actually exercised.
    off_w = 0.1 * jax.random.normal(k2, (dg * 3 * KK, Cin // dg, KSIZE, KSIZE), jnp.float32)
    off_b = 0.05 * jax.random.normal(k3, (dg * 3 * KK,), jnp.float32)

    # ModulatedDeformConv weight (groups=1, bias=False): (Cout, Cin, K, K).
    def_w = (1.0 / (Cin * KK) ** 0.5) * jax.random.normal(
        k4, (Cout, Cin, KSIZE, KSIZE), jnp.float32
    )

    fwd = jax.jit(functools.partial(deform_conv2d_forward, double_mask=True))
    out = jax.block_until_ready(fwd(x, off_w, off_b, def_w))
    assert out.shape == (B, Cout, H, W), out.shape

    ref_fn = jax.jit(functools.partial(deform_conv2d_reference, double_mask=True))
    ref = jax.block_until_ready(ref_fn(x, off_w, off_b, def_w))

    # bf16 MXU operands in the Pallas path vs f32 reference -> loosened tolerance.
    max_err = float(jnp.max(jnp.abs(out - ref)))
    assert jnp.allclose(out, ref, atol=5e-2, rtol=5e-2), max_err

    print("KERNEL_OK")
</pallas_src>

<mosaic_0001>
module attributes {stable_mosaic.version = 11 : i64} {
  func.func @_deform_matmul_kernel(%arg0: i32, %arg1: i32, %arg2: i32, %arg3: memref<1x36x256xbf16, #tpu.memory_space<vmem>>, %arg4: memref<8x36xbf16, #tpu.memory_space<vmem>>, %arg5: memref<1x8x256xf32, #tpu.memory_space<vmem>>, %arg6: memref<8x256xf32, #tpu.memory_space<vmem>>) attributes {dimension_semantics = [#tpu.dimension_semantics<parallel>, #tpu.dimension_semantics<parallel>, #tpu.dimension_semantics<arbitrary>], iteration_bounds = array<i64: 2, 1, 1>, scalar_prefetch = 0 : i64, scratch_operands = 1 : i64, tpu.core_type = #tpu.core_type<tc>, window_params = [{transform_indices = @transform_0, window_bounds = array<i64: 1, 36, 256>}, {transform_indices = @transform_1, window_bounds = array<i64: 8, 36>}, {transform_indices = @transform_2, window_bounds = array<i64: 1, 8, 256>}]} {
    %c0_i32 = arith.constant 0 : i32
    %0 = arith.cmpi eq, %arg2, %c0_i32 : i32
    %1 = arith.extui %0 : i1 to i32
    %c0_i32_0 = arith.constant 0 : i32
    %2 = arith.cmpi ne, %1, %c0_i32_0 : i32
    scf.if %2 {
      %cst_11 = arith.constant 0.000000e+00 : f32
      %13 = vector.broadcast %cst_11 : f32 to vector<8x256xf32>
      %c0_12 = arith.constant 0 : index
      %c0_13 = arith.constant 0 : index
      %14 = vector.load %arg6[%c0_12, %c0_13] : memref<8x256xf32, #tpu.memory_space<vmem>>, vector<8x256xf32>
      tpu.vector_store %arg6[%c0_12, %c0_13], %13 {strides = array<i32>} : memref<8x256xf32, #tpu.memory_space<vmem>>, vector<8x256xf32>,
    } else {
    }
    %c0 = arith.constant 0 : index
    %c0_1 = arith.constant 0 : index
    %3 = vector.load %arg6[%c0, %c0_1] : memref<8x256xf32, #tpu.memory_space<vmem>>, vector<8x256xf32>
    %c0_2 = arith.constant 0 : index
    %c0_3 = arith.constant 0 : index
    %4 = vector.load %arg4[%c0_2, %c0_3] : memref<8x36xbf16, #tpu.memory_space<vmem>>, vector<8x36xbf16>
    %c0_4 = arith.constant 0 : index
    %c0_5 = arith.constant 0 : index
    %c0_6 = arith.constant 0 : index
    %5 = vector.load %arg3[%c0_4, %c0_5, %c0_6] : memref<1x36x256xbf16, #tpu.memory_space<vmem>>, vector<1x36x256xbf16>
    %6 = vector.shape_cast %5 : vector<1x36x256xbf16> to vector<36x256xbf16>
    %cst = arith.constant dense<0.000000e+00> : vector<8x256xf32>
    %7 = tpu.matmul %4, %6, %cst {dimension_numbers = #tpu.dot_dimension_numbers<[1], [0], [0], [1], [0, 0, 1, 1], [], []>} : vector<8x36xbf16>, vector<36x256xbf16>, vector<8x256xf32> -> vector<8x256xf32>
    %8 = arith.addf %3, %7 : vector<8x256xf32>
    %c0_7 = arith.constant 0 : index
    %c0_8 = arith.constant 0 : index
    %9 = vector.load %arg6[%c0_7, %c0_8] : memref<8x256xf32, #tpu.memory_space<vmem>>, vector<8x256xf32>
    tpu.vector_store %arg6[%c0_7, %c0_8], %8 {strides = array<i32>} : memref<8x256xf32, #tpu.memory_space<vmem>>, vector<8x256xf32>,
    %c0_i32_9 = arith.constant 0 : i32
    %10 = arith.cmpi eq, %arg2, %c0_i32_9 : i32
    %11 = arith.extui %10 : i1 to i32
    %c0_i32_10 = arith.constant 0 : i32
    %12 = arith.cmpi ne, %11, %c0_i32_10 : i32
    scf.if %12 {
      %c0_11 = arith.constant 0 : index
      %c0_12 = arith.constant 0 : index
      %13 = vector.load %arg6[%c0_11, %c0_12] : memref<8x256xf32, #tpu.memory_space<vmem>>, vector<8x256xf32>
      %c0_13 = arith.constant 0 : index
      %c0_14 = arith.constant 0 : index
      %c0_15 = arith.constant 0 : index
      %14 = vector.load %arg5[%c0_13, %c0_14, %c0_15] : memref<1x8x256xf32, #tpu.memory_space<vmem>>, vector<1x8x256xf32>
      %15 = vector.shape_cast %14 : vector<1x8x256xf32> to vector<8x256xf32>
      %16 = vector.shape_cast %13 : vector<8x256xf32> to vector<1x8x256xf32>
      tpu.vector_store %arg5[%c0_13, %c0_14, %c0_15], %16 {strides = array<i32>} : memref<1x8x256xf32, #tpu.memory_space<vmem>>, vector<1x8x256xf32>,
    } else {
    }
    return
  }
  func.func @transform_0(%arg0: i32, %arg1: i32, %arg2: i32) -> (i32, i32, i32) {
    %c0_i32 = arith.constant 0 : i32
    return %arg0, %arg2, %arg1 : i32, i32, i32
  }
  func.func @transform_1(%arg0: i32, %arg1: i32, %arg2: i32) -> (i32, i32) {
    %c0_i32 = arith.constant 0 : i32
    %c0_i32_0 = arith.constant 0 : i32
    return %c0_i32, %arg2 : i32, i32
  }
  func.func @transform_2(%arg0: i32, %arg1: i32, %arg2: i32) -> (i32, i32, i32) {
    %c0_i32 = arith.constant 0 : i32
    %c0_i32_0 = arith.constant 0 : i32
    return %arg0, %c0_i32, %arg1 : i32, i32, i32
  }
}

</mosaic_0001>

<llo_original>
// kernel: deform_conv2d_forward.1
$region0: #{deform_conv2d_forward.1}
  #allocation0 [shape = 'u32[]', space=smem, size = 0x4, offset = 0x4, fixed_abs, tag = 'smem constant byte address 0x4 - core index']
  #allocation1 [shape = 'u32[144,128]{1,0:T(1,128)}', space=vmem, size = 0x12000, scoped, tag = 'internal scratch']
  #allocation2 [shape = 'f32[8,256]{1,0:T(8,128)}', space=vmem, size = 0x2000, scoped, tag = 'scratch operand']
  %s0 = inlined_call_operand.vmem [shape: bf16[2,36,256], index: 0, kind: input, shape index: {}]
  %s1 = inlined_call_operand.vmem [shape: bf16[8,36], index: 1, kind: input, shape index: {}]
  %s2 = inlined_call_operand.vmem [shape: f32[2,8,256], index: 2, kind: output, shape index: {}]
  %s3 = sld [smem:[#allocation0]]
  $region49: #{deform_conv2d_forward.1} parent=0
    _
  %s5 = ssub.s32 1, %s3
  %s6 = scalar_select 0, %s5, %s3
  loop: start=0, step=1, limit=4
  $region2: #{deform_conv2d_forward.1} parent=0 // loop_pre_header
    _
  $region3: #{deform_conv2d_forward.1} parent=0 // loop_header
    %s8 = sphi 0, %s12
    %p9 = scmp.ge.s32.totalorder %s8, 4
    %s15 = sphi 0, %s34
    %s16 = sphi 0, %s30
    %s17 = sphi 0, %s26
    %s18 = sphi 0, %s15
    %s19 = sphi 0, %s16
    %s20 = sphi 0, %s17
    %s21 = sphi 0, %s18
    %s22 = sphi 0, %s19
    %s23 = sphi 0, %s20
    %s41 = sphi 0, %s43
    %s44 = sphi 0, %s41
    %s45 = sphi 0, %s44
    %s61 = sphi 0, %s45
    %s67 = sphi 0, %s69
    %s70 = sphi 0, %s67
    %s71 = sphi 0, %s70
    %s87 = sphi 0, %s71
    %s95 = sphi 0, %s97
    %s98 = sphi 0, %s95
    %s99 = sphi 0, %s98
    %s115 = sphi 0, %s99
  $region4: #{deform_conv2d_forward.1} parent=0 // loop_header_branch
    %11 = sbr.rel (%p9) target = $region8
  $region5: #{deform_conv2d_forward.1} parent=0 // loop_body
    %s13 = ssub.s32 %s8, 1
    %s14 = ssub.s32 %s8, 2
    %s24 = sadd.s32 1, %s17
    %p25 = scmp.ge.s32.totalorder %s24, 1
    %s26 = scalar_select %p25, 0, %s24
    %s27 = sadd.s32 1, %s16
    %s28 = scalar_select %p25, %s27, %s16
    %p29 = scmp.ge.s32.totalorder %s28, 1
    %s30 = scalar_select %p29, 0, %s28
    %s31 = sadd.s32 1, %s15
    %s32 = scalar_select %p29, %s31, %s15
    %p33 = scmp.ge.s32.totalorder %s32, 2
    %s34 = scalar_select %p33, 0, %s32
    %s35 = ssub.s32 %s15, %s34
    %s36 = ssub.s32 %s17, %s26
    %s37 = sor.u32 %s35, %s36
    %s38 = ssub.s32 %s16, %s30
    %s39 = sor.u32 %s37, %s38
    %p40 = scmp.eq.s32.totalorder %s39, 0
    %s42 = sadd.s32 %s41, 1
    %s43 = scalar_select %p40, %s41, %s42
    %p46 = pneg %p40
    %p47 = scmp.eq.s32.totalorder %s8, 1
    %p48 = por %p46, %p47
    %p49 = scmp.ne.s32.totalorder %s41, %s44
    %p50 = scmp.eq.s32.totalorder %s8, 0
    %p51 = por %p49, %p50
    %p52 = scmp.ne.s32.totalorder %s41, %s44
    %p53 = scmp.eq.s32.totalorder %s13, 1
    %p54 = por %p52, %p53
    %p55 = scmp.ne.s32.totalorder %s44, %s45
    %p56 = scmp.eq.s32.totalorder %s13, 0
    %p57 = por %p55, %p56
    %p58 = scmp.ne.s32.totalorder %s44, %s45
    %p59 = scmp.eq.s32.totalorder %s14, 1
    %p60 = por %p58, %p59
    %p62 = scmp.ne.s32.totalorder %s45, %s61
    %p63 = scmp.eq.s32.totalorder %s14, 0
    %p64 = por %p62, %p63
    %s65 = ssub.s32 %s17, %s26
    %p66 = scmp.eq.s32.totalorder %s65, 0
    %s68 = sadd.s32 %s67, 1
    %s69 = scalar_select %p66, %s67, %s68
    %p72 = pneg %p66
    %p73 = scmp.eq.s32.totalorder %s8, 1
    %p74 = por %p72, %p73
    %p75 = scmp.ne.s32.totalorder %s67, %s70
    %p76 = scmp.eq.s32.totalorder %s8, 0
    %p77 = por %p75, %p76
    %p78 = scmp.ne.s32.totalorder %s67, %s70
    %p79 = scmp.eq.s32.totalorder %s13, 1
    %p80 = por %p78, %p79
    %p81 = scmp.ne.s32.totalorder %s70, %s71
    %p82 = scmp.eq.s32.totalorder %s13, 0
    %p83 = por %p81, %p82
    %p84 = scmp.ne.s32.totalorder %s70, %s71
    %p85 = scmp.eq.s32.totalorder %s14, 1
    %p86 = por %p84, %p85
    %p88 = scmp.ne.s32.totalorder %s71, %s87
    %p89 = scmp.eq.s32.totalorder %s14, 0
    %p90 = por %p88, %p89
    %s91 = ssub.s32 %s15, %s34
    %s92 = ssub.s32 %s16, %s30
    %s93 = sor.u32 %s91, %s92
    %p94 = scmp.eq.s32.totalorder %s93, 0
    %s96 = sadd.s32 %s95, 1
    %s97 = scalar_select %p94, %s95, %s96
    %p100 = pneg %p94
    %p101 = scmp.eq.s32.totalorder %s8, 1
    %p102 = por %p100, %p101
    %p103 = scmp.ne.s32.totalorder %s95, %s98
    %p104 = scmp.eq.s32.totalorder %s8, 0
    %p105 = por %p103, %p104
    %p106 = scmp.ne.s32.totalorder %s95, %s98
    %p107 = scmp.eq.s32.totalorder %s13, 1
    %p108 = por %p106, %p107
    %p109 = scmp.ne.s32.totalorder %s98, %s99
    %p110 = scmp.eq.s32.totalorder %s13, 0
    %p111 = por %p109, %p110
    %p112 = scmp.ne.s32.totalorder %s98, %s99
    %p113 = scmp.eq.s32.totalorder %s14, 1
    %p114 = por %p112, %p113
    %p116 = scmp.ne.s32.totalorder %s99, %s115
    %p117 = scmp.eq.s32.totalorder %s14, 0
    %p118 = por %p116, %p117
    %p119 = scmp.le.s32.totalorder 1, %s8
    %p120 = scmp.lt.s32.totalorder %s8, 3
    %p121 = pnand %p119, %p120
    %p122 = pneg %p121
    // Predicated region
    $region9: #{deform_conv2d_forward.1} parent=5 // pred_check
      _
    $region10: #{deform_conv2d_forward.1} parent=5 // pred_check_branch
      %124 = sbr.rel (%p121) target = $region12
    $region11: #{deform_conv2d_forward.1} parent=5 // pred_region
      %s125 = ssub.s32 %s8, 1
      // Predicated region
      $region13: #{deform_conv2d_forward.1} parent=11 // pred_check
        %p126 = pneg %p83
      $region14: #{deform_conv2d_forward.1} parent=11 // pred_check_branch
        %128 = sbr.rel (%p126) target = $region16
      $region15: #{deform_conv2d_forward.1} parent=11 // pred_region
        %p129 = scmp.lt.s32.totalorder %s20, 0
        %s130 = scalar_select %p129, %s20, 0
        %s131 = smul.addr %s130, 4
        %s132 = scalar_lea.vmem %s1, %s131
      $region16: #{deform_conv2d_forward.1} parent=11 // pred_fallthru
        _
    $region12: #{deform_conv2d_forward.1} parent=5 // pred_fallthru
      _
    %p133 = scmp.lt.s32.totalorder %s8, 2
    // Predicated region
    $region17: #{deform_conv2d_forward.1} parent=5 // pred_check
      %p134 = pneg %p133
    $region18: #{deform_conv2d_forward.1} parent=5 // pred_check_branch
      %136 = sbr.rel (%p134) target = $region20
    $region19: #{deform_conv2d_forward.1} parent=5 // pred_region
      // Predicated region
      $region21: #{deform_conv2d_forward.1} parent=19 // pred_check
        %p137 = pneg %p51
      $region22: #{deform_conv2d_forward.1} parent=19 // pred_check_branch
        %139 = sbr.rel (%p137) target = $region24
      $region23: #{deform_conv2d_forward.1} parent=19 // pred_region
        %s140 = smul.u32 5, %s17
        %s141 = smul.u32 2, %s16
        %p142 = scmp.lt.s32.totalorder %s15, 1
        %s143 = scalar_select %p142, %s15, 1
        %p144 = scmp.lt.s32.totalorder %s140, 4
        %s145 = scalar_select %p144, %s140, 4
        %p146 = scmp.lt.s32.totalorder %s141, 1
        %s147 = scalar_select %p146, %s141, 1
        %s148 = smul.addr %s145, 2
        %s149 = sadd.s32 %s147, %s148
        %s150 = smul.addr %s143, 10
        %s151 = sadd.s32 %s149, %s150
        %s152 = smul.addr %s151, 4
        %s153 = scalar_lea.vmem %s0, %s152
        %s154 = smul.u32 5, %s17
        %s155 = smul.u32 2, %s16
      $region24: #{deform_conv2d_forward.1} parent=19 // pred_fallthru
        _
    $region20: #{deform_conv2d_forward.1} parent=5 // pred_fallthru
      _
    %p156 = scmp.le.s32.totalorder 1, %s8
    %p157 = scmp.lt.s32.totalorder %s8, 3
    %p158 = pnand %p156, %p157
    %p159 = pneg %p158
    // Predicated region
    $region25: #{deform_conv2d_forward.1} parent=5 // pred_check
      _
    $region26: #{deform_conv2d_forward.1} parent=5 // pred_check_branch
      %161 = sbr.rel (%p158) target = $region28
    $region27: #{deform_conv2d_forward.1} parent=5 // pred_region
      %s162 = ssub.s32 %s8, 1
      %s163 = smul.u32 5, %s20
      %s164 = smul.u32 2, %s19
      %p165 = scmp.lt.s32.totalorder %s18, 1
      %s166 = scalar_select %p165, %s18, 1
      %p167 = scmp.lt.s32.totalorder %s163, 4
      %s168 = scalar_select %p167, %s163, 4
      %p169 = scmp.lt.s32.totalorder %s164, 1
      %s170 = scalar_select %p169, %s164, 1
      %s171 = smul.addr %s168, 2
      %s172 = sadd.s32 %s170, %s171
      %s173 = smul.addr %s166, 10
      %s174 = sadd.s32 %s172, %s173
      %s175 = smul.addr %s174, 4
      %s176 = scalar_lea.vmem %s0, %s175
      %p177 = pneg %p57
      %p178 = pneg %p54
      %p179 = scmp.lt.s32.totalorder %s20, 0
      %s180 = scalar_select %p179, %s20, 0
      %s181 = smul.addr %s180, 4
      %s182 = scalar_lea.vmem %s1, %s181
      %p183 = pneg %p83
      %p184 = pneg %p80
      %p185 = pneg %p111
      %p186 = pneg %p108
      %s187 = smul.u32 2, %s19
      %p188 = scmp.lt.s32.totalorder %s18, 1
      %s189 = scalar_select %p188, %s18, 1
      %p190 = scmp.lt.s32.totalorder %s187, 1
      %s191 = scalar_select %p190, %s187, 1
      %s192 = smul.addr %s189, 2
      %s193 = sadd.s32 %s191, %s192
      %s194 = smul.addr %s193, 8
      %s195 = scalar_lea.vmem %s2, %s194
      %s196 = smul.u32 5, %s20
      %s197 = smul.u32 2, %s19
      %p198 = scmp.lt.s32.totalorder %s18, 1
      %s199 = scalar_select %p198, %s18, 1
      %p200 = scmp.lt.s32.totalorder %s196, 4
      %s201 = scalar_select %p200, %s196, 4
      %p202 = scmp.lt.s32.totalorder %s197, 1
      %s203 = scalar_select %p202, %s197, 1
      %s204 = smul.addr %s201, 2
      %s205 = sadd.s32 %s203, %s204
      %s206 = smul.addr %s199, 10
      %s207 = sadd.s32 %s205, %s206
      %s208 = smul.addr %s207, 4
      %s209 = scalar_lea.vmem %s0, %s208
      %s210 = smul.u32 5, %s20
      %s211 = smul.u32 2, %s19
      %p212 = scmp.lt.s32.totalorder %s20, 0
      %s213 = scalar_select %p212, %s20, 0
      %s214 = smul.addr %s213, 4
      %s215 = scalar_lea.vmem %s1, %s214
      %s216 = smul.u32 2, %s19
      %p217 = scmp.lt.s32.totalorder %s18, 1
      %s218 = scalar_select %p217, %s18, 1
      %p219 = scmp.lt.s32.totalorder %s216, 1
      %s220 = scalar_select %p219, %s216, 1
      %s221 = smul.addr %s218, 2
      %s222 = sadd.s32 %s220, %s221
      %s223 = smul.addr %s222, 8
      %s224 = scalar_lea.vmem %s2, %s223
      %s225 = smul.u32 2, %s19
      %p227 = scmp.eq.s32.totalorder %s20, 0
      // Predicated region
      $region29: #{deform_conv2d_forward.1} parent=27 // pred_check
        %p228 = pneg %p227
      $region30: #{deform_conv2d_forward.1} parent=27 // pred_check_branch
        %230 = sbr.rel (%p228) target = $region32
      $region31: #{deform_conv2d_forward.1} parent=27 // pred_region
        %231 = vst [vmem:[#allocation2] sm:$0xff] 0.0
        %232 = vst [vmem:[#allocation2 + $0x8] sm:$0xff] 0.0
      $region32: #{deform_conv2d_forward.1} parent=27 // pred_fallthru
        _
      %v233 = vld [vmem:[#allocation2] sm:$0xff]
      %v234 = vld [vmem:[#allocation2 + $0x8] sm:$0xff]
      %v235 = vld [vmem:[%s215] sm:$0xf]
      %v236 = vld [vmem:[%s209] sm:$0xff]
      %v237 = vld [vmem:[%s209 + $0x8] sm:$0xff]
      %v238 = vld [vmem:[%s209 + $0x10] sm:$0xff]
      %v239 = vld [vmem:[%s209 + $0x18] sm:$0xff]
      %v240 = vld [vmem:[%s209 + $0x20] sm:$0x33]
      %v246 = vunpack.c.l.b16 %v236
      %v247 = vunpack.c.h.b16 %v236
      %v248 = vunpack.c.l.b16 %v237
      %v249 = vunpack.c.h.b16 %v237
      %v250 = vunpack.c.l.b16 %v238
      %v251 = vunpack.c.h.b16 %v238
      %v252 = vunpack.c.l.b16 %v239
      %v253 = vunpack.c.h.b16 %v239
      %v254 = vunpack.c.l.b16 %v240
      %v255 = vunpack.c.h.b16 %v240
      %v256 = vpack.c.b16 %v248, %v246
      %v257 = vpack.c.b16 %v249, %v247
      %v258 = vpack.c.b16 %v252, %v250
      %v259 = vpack.c.b16 %v253, %v251
      %v260 = vpack.c.b16 %v254, %v254
      %v261 = vpack.c.b16 %v255, %v255
      %vm266 = vcmask 293888
      %v268 = vsel %vm266, %v235, 0
      %vm270 = vcmask 1041408
      %v272 = vsel %vm270, %v260, 0
      %v275 = vsel %vm270, %v261, 0
      %277 = vmatprep.subr.bf16.mxu0 0
      %278 = vmatpush1.bf16.msra.mxu0 0
      %279 = vmatprep.subr.bf16.mxu0 0
      %280 = vmatpush1.bf16.msra.mxu0 0
      %281 = vmatprep.subr.bf16.mxu0 0
      %282 = vmatpush1.bf16.msra.mxu0 0
      %283 = vmatprep.subr.bf16.mxu0 0
      %284 = vmatpush1.bf16.msra.mxu0 0
      %285 = vmatprep.subr.bf16.mxu0 0
      %286 = vmatpush1.bf16.msra.mxu0 0
      %287 = vmatprep.subr.bf16.mxu0 %v275
      %288 = vmatpush1.bf16.msra.mxu0 %v272
      %289 = vmatprep.subr.bf16.mxu0 %v259
      %290 = vmatpush1.bf16.msra.mxu0 %v258
      %291 = vmatprep.subr.bf16.mxu0 %v257
      %292 = vmatpush1.bf16.msra.mxu0 %v256
      %293 = vmatprep.subr.bf16.mxu0 0
      %294 = vmatpush2.bf16.msra.mxu0 0
      %295 = vmatprep.subr.bf16.mxu0 0
      %296 = vmatpush2.bf16.msra.mxu0 0
      %297 = vmatprep.subr.bf16.mxu0 0
      %298 = vmatpush2.bf16.msra.mxu0 0
      %299 = vmatprep.subr.bf16.mxu0 0
      %300 = vmatpush2.bf16.msra.mxu0 0
      %301 = vmatprep.subr.bf16.mxu0 0
      %302 = vmatpush2.bf16.msra.mxu0 0
      %303 = vmatprep.subr.bf16.mxu0 0
      %304 = vmatpush2.bf16.msra.mxu0 0
      %305 = vmatprep.subr.bf16.mxu0 0
      %306 = vmatpush2.bf16.msra.mxu0 0
      %307 = vmatprep.subr.bf16.mxu0 0
      %308 = vmatpush2.bf16.msra.mxu0 0
      %309 = vmatprep.mubr.bf16.mxu0 0
      %310 = vmatmul.mubr.bf16.gmra.mxu0 %v268
      %v311 = vpop.f32.mrf.mxu0
      %v312 = vadd.f32 0.0, %v311
      %v313 = vpop.f32.mrf.mxu0
      %v314 = vadd.f32 0.0, %v313
      %v315 = vpop.f32.mrf.mxu0
      %v316 = vpop.f32.mrf.mxu0
      %317 = vdwg.mxu0
      %v318 = vadd.f32 %v233, %v312
      %v319 = vadd.f32 %v234, %v314
      %320 = vst [vmem:[#allocation2] sm:$0xff] %v318
      %321 = vst [vmem:[#allocation2 + $0x8] sm:$0xff] %v319
      // Predicated region
      $region33: #{deform_conv2d_forward.1} parent=27 // pred_check
        %p322 = pneg %p227
      $region34: #{deform_conv2d_forward.1} parent=27 // pred_check_branch
        %324 = sbr.rel (%p322) target = $region36
      $region35: #{deform_conv2d_forward.1} parent=27 // pred_region
        %v325 = vld [vmem:[#allocation2] sm:$0xff]
        %v326 = vld [vmem:[#allocation2 + $0x8] sm:$0xff]
        %327 = vst [vmem:[%s224] sm:$0xff] %v325
        %328 = vst [vmem:[%s224 + $0x8] sm:$0xff] %v326
      $region36: #{deform_conv2d_forward.1} parent=27 // pred_fallthru
        _
      %s329 = smul.u32 2, %s19
      %p330 = scmp.lt.s32.totalorder %s18, 1
      %s331 = scalar_select %p330, %s18, 1
      %p332 = scmp.lt.s32.totalorder %s329, 1
      %s333 = scalar_select %p332, %s329, 1
      %s334 = smul.addr %s331, 2
      %s335 = sadd.s32 %s333, %s334
      %s336 = smul.addr %s335, 8
      %s337 = scalar_lea.vmem %s2, %s336
      // Predicated region
      $region37: #{deform_conv2d_forward.1} parent=27 // pred_check
        %p338 = pneg %p108
      $region38: #{deform_conv2d_forward.1} parent=27 // pred_check_branch
        %340 = sbr.rel (%p338) target = $region40
      $region39: #{deform_conv2d_forward.1} parent=27 // pred_region
        %s341 = smul.u32 2, %s19
      $region40: #{deform_conv2d_forward.1} parent=27 // pred_fallthru
        _
    $region28: #{deform_conv2d_forward.1} parent=5 // pred_fallthru
      _
    %p342 = scmp.le.s32.totalorder 2, %s8
    // Predicated region
    $region41: #{deform_conv2d_forward.1} parent=5 // pred_check
      %p343 = pneg %p342
    $region42: #{deform_conv2d_forward.1} parent=5 // pred_check_branch
      %345 = sbr.rel (%p343) target = $region44
    $region43: #{deform_conv2d_forward.1} parent=5 // pred_region
      %s346 = ssub.s32 %s8, 2
      // Predicated region
      $region45: #{deform_conv2d_forward.1} parent=43 // pred_check
        %p347 = pneg %p114
      $region46: #{deform_conv2d_forward.1} parent=43 // pred_check_branch
        %349 = sbr.rel (%p347) target = $region48
      $region47: #{deform_conv2d_forward.1} parent=43 // pred_region
        %s350 = smul.u32 2, %s22
        %p351 = scmp.lt.s32.totalorder %s21, 1
        %s352 = scalar_select %p351, %s21, 1
        %p353 = scmp.lt.s32.totalorder %s350, 1
        %s354 = scalar_select %p353, %s350, 1
        %s355 = smul.addr %s352, 2
        %s356 = sadd.s32 %s354, %s355
        %s357 = smul.addr %s356, 8
        %s358 = scalar_lea.vmem %s2, %s357
      $region48: #{deform_conv2d_forward.1} parent=43 // pred_fallthru
        _
    $region44: #{deform_conv2d_forward.1} parent=5 // pred_fallthru
      _
  $region6: #{deform_conv2d_forward.1} parent=0 // loop_footer
    %s12 = sadd.s32 1, %s8
  $region7: #{deform_conv2d_forward.1} parent=0 // loop_footer_branch
    %7 = sbr.rel target = $region3
  $region8: #{deform_conv2d_forward.1} parent=0 // loop_exit
    _

</llo_original>
